<compile_context>
chip_gen: v7x
topology: tpu7x:2x2x1
jax: 0.10.0
libtpu: 0.0.40
codegen_flags: <defaults>
</compile_context>

<pallas_src>
import functools

import jax
import jax.numpy as jnp
from jax import lax
from jax.experimental import pallas as pl
from jax.experimental.pallas import tpu as pltpu


def _round_up(x, m):
    return ((x + m - 1) // m) * m


def _mlp_kernel(x_ref, w1_ref, b1_ref, w2_ref, b2_ref, o_ref, acc_ref, *, approximate):
    # x_ref: (tm, Cin_p), w1: (Cin_p, tk), b1: (1, tk),
    # w2: (tk, Cout_p), b2: (1, Cout_p), o: (tm, Cout_p), acc: (tm, Cout_p) f32
    k = pl.program_id(1)

    @pl.when(k == 0)
    def _():
        acc_ref[...] = jnp.zeros_like(acc_ref)

    # Feed the MXU in the native input dtype; accumulate in f32.
    h = jnp.dot(x_ref[...], w1_ref[...], preferred_element_type=jnp.float32)
    h = h + b1_ref[...]

    if approximate:
        # tanh-approx GELU (EUP path) — opt-in; default matches torch's exact GELU.
        c = jnp.float32(0.7978845608028654)  # sqrt(2/pi)
        h = 0.5 * h * (1.0 + jnp.tanh(c * (h + 0.044715 * (h * h * h))))
    else:
        # Exact (erf-based) GELU, matching torch.nn.functional.gelu default.
        inv_sqrt2 = jnp.float32(0.7071067811865476)
        h = 0.5 * h * (1.0 + lax.erf(h * inv_sqrt2))

    acc_ref[...] += jnp.dot(h.astype(w2_ref.dtype), w2_ref[...],
                            preferred_element_type=jnp.float32)

    @pl.when(k == pl.num_programs(1) - 1)
    def _():
        o_ref[...] = (acc_ref[...] + b2_ref[...]).astype(o_ref.dtype)


@functools.partial(jax.jit, static_argnames=("tm", "tk", "approximate_gelu"))
def mlp_forward(x_nchw, w1, b1, w2, b2, *, tm=512, tk=256, approximate_gelu=False):
    """x_nchw: (N, Cin, H, W). w1: (Cin, Cmid), b1: (Cmid,), w2: (Cmid, Cout), b2: (Cout,)."""
    n, cin, hh, ww = x_nchw.shape
    cmid = w1.shape[1]
    cout = w2.shape[1]
    m = n * hh * ww

    # Lane-dense channel padding (multiples of 128).
    cin_pad = _round_up(cin, 128)
    cout_pad = _round_up(cout, 128)
    cmid_128 = _round_up(cmid, 128)
    tk_eff = min(tk, cmid_128)                 # tk is a multiple of 128 by construction
    cmid_pad = _round_up(cmid, tk_eff)         # multiple of tk_eff (and of 128)

    # M tile: large for HBM roofline, but keep >=2 M tiles when m allows (megacore).
    tm_eff = min(tm, max(128, _round_up(pl.cdiv(m, 2), 128)))
    m_pad = _round_up(m, tm_eff)

    # NCHW -> NHWC -> (M, Cin), padded (pad fuses with the transpose copy in XLA).
    x_flat = jnp.transpose(x_nchw, (0, 2, 3, 1)).reshape(m, cin)
    x_flat = jnp.pad(x_flat, ((0, m_pad - m), (0, cin_pad - cin)))

    w1_p = jnp.pad(w1, ((0, cin_pad - cin), (0, cmid_pad - cmid)))
    b1_p = jnp.pad(b1, ((0, cmid_pad - cmid),)).reshape(1, cmid_pad)
    w2_p = jnp.pad(w2, ((0, cmid_pad - cmid), (0, cout_pad - cout)))
    b2_p = jnp.pad(b2, ((0, cout_pad - cout),)).reshape(1, cout_pad)

    grid = (m_pad // tm_eff, cmid_pad // tk_eff)

    out_flat = pl.pallas_call(
        functools.partial(_mlp_kernel, approximate=approximate_gelu),
        out_shape=jax.ShapeDtypeStruct((m_pad, cout_pad), x_nchw.dtype),
        grid_spec=pltpu.PrefetchScalarGridSpec(
            num_scalar_prefetch=0,
            grid=grid,
            in_specs=[
                pl.BlockSpec((tm_eff, cin_pad), lambda i, k: (i, 0)),   # x (resident over k)
                pl.BlockSpec((cin_pad, tk_eff), lambda i, k: (0, k)),   # w1 k-slice
                pl.BlockSpec((1, tk_eff), lambda i, k: (0, k)),         # b1 k-slice
                pl.BlockSpec((tk_eff, cout_pad), lambda i, k: (k, 0)),  # w2 k-slice
                pl.BlockSpec((1, cout_pad), lambda i, k: (0, 0)),       # b2
            ],
            out_specs=pl.BlockSpec((tm_eff, cout_pad), lambda i, k: (i, 0)),
            scratch_shapes=[pltpu.VMEM((tm_eff, cout_pad), jnp.float32)],
        ),
        compiler_params=pltpu.CompilerParams(
            dimension_semantics=("parallel", "arbitrary"),
            # Explicit scoped VMEM budget; stays within v7x's 64 MiB physical with headroom.
            vmem_limit_bytes=48 * 1024 * 1024,
        ),
    )(x_flat, w1_p, b1_p, w2_p, b2_p)

    # (M_pad, Cout_pad) -> (M, Cout) -> NHWC -> NCHW (slice + transpose fuse).
    out = out_flat[:m, :cout].reshape(n, hh, ww, cout).transpose(0, 3, 1, 2)
    return out


def init_params(key, in_channels, mid_channels, out_channels, dtype=jnp.float32):
    """Deterministic init mimicking nn.Conv2d defaults (uniform(-1/sqrt(fan_in), 1/sqrt(fan_in)))."""
    k1, k2, k3, k4 = jax.random.split(key, 4)
    bound1 = 1.0 / jnp.sqrt(in_channels)
    bound2 = 1.0 / jnp.sqrt(mid_channels)
    # Conv2d weight (out, in, 1, 1) stored transposed as (in, out) for matmul.
    w1 = jax.random.uniform(k1, (in_channels, mid_channels), dtype, -bound1, bound1)
    b1 = jax.random.uniform(k2, (mid_channels,), dtype, -bound1, bound1)
    w2 = jax.random.uniform(k3, (mid_channels, out_channels), dtype, -bound2, bound2)
    b2 = jax.random.uniform(k4, (out_channels,), dtype, -bound2, bound2)
    return w1, b1, w2, b2


def _reference(x_nchw, w1, b1, w2, b2):
    x = jnp.transpose(x_nchw, (0, 2, 3, 1))            # NHWC
    h = jnp.einsum("nhwc,cm->nhwm", x, w1) + b1
    h = jax.nn.gelu(h, approximate=False)
    o = jnp.einsum("nhwm,mo->nhwo", h, w2) + b2
    return jnp.transpose(o, (0, 3, 1, 2))              # NCHW


if __name__ == "__main__":
    key = jax.random.PRNGKey(0)
    kx, kp = jax.random.split(key)

    N, CIN, CMID, COUT, H, W = 2, 4, 32, 4, 16, 16
    x = jax.random.normal(kx, (N, CIN, H, W), dtype=jnp.float32)
    w1, b1, w2, b2 = init_params(kp, CIN, CMID, COUT)

    out = mlp_forward(x, w1, b1, w2, b2)
    out = jax.block_until_ready(out)

    ref = _reference(x, w1, b1, w2, b2)
    assert out.shape == (N, COUT, H, W), out.shape
    assert jnp.allclose(out, ref, atol=1e-5, rtol=1e-5), float(jnp.max(jnp.abs(out - ref)))

    print("KERNEL_OK")
</pallas_src>

<mosaic_0001>
module attributes {stable_mosaic.version = 11 : i64} {
  func.func @_mlp_kernel(%arg0: i32, %arg1: i32, %arg2: memref<256x128xf32, #tpu.memory_space<vmem>>, %arg3: memref<128x128xf32, #tpu.memory_space<vmem>>, %arg4: memref<1x128xf32, #tpu.memory_space<vmem>>, %arg5: memref<128x128xf32, #tpu.memory_space<vmem>>, %arg6: memref<1x128xf32, #tpu.memory_space<vmem>>, %arg7: memref<256x128xf32, #tpu.memory_space<vmem>>, %arg8: memref<256x128xf32, #tpu.memory_space<vmem>>) attributes {dimension_semantics = [#tpu.dimension_semantics<parallel>, #tpu.dimension_semantics<arbitrary>], iteration_bounds = array<i64: 2, 1>, scalar_prefetch = 0 : i64, scratch_operands = 1 : i64, tpu.core_type = #tpu.core_type<tc>, window_params = [{transform_indices = @transform_0, window_bounds = array<i64: 256, 128>}, {transform_indices = @transform_1, window_bounds = array<i64: 128, 128>}, {transform_indices = @transform_2, window_bounds = array<i64: 1, 128>}, {transform_indices = @transform_3, window_bounds = array<i64: 128, 128>}, {pipeline_mode = #tpu.pipeline_mode<synchronous>, transform_indices = @transform_4, window_bounds = array<i64: 1, 128>}, {transform_indices = @transform_5, window_bounds = array<i64: 256, 128>}]} {
    %c0_i32 = arith.constant 0 : i32
    %0 = arith.cmpi eq, %arg1, %c0_i32 : i32
    %1 = arith.extui %0 : i1 to i32
    %c0_i32_0 = arith.constant 0 : i32
    %2 = arith.cmpi ne, %1, %c0_i32_0 : i32
    scf.if %2 {
      %cst_18 = arith.constant 0.000000e+00 : f32
      %25 = vector.broadcast %cst_18 : f32 to vector<256x128xf32>
      %c0_19 = arith.constant 0 : index
      %c0_20 = arith.constant 0 : index
      %26 = vector.load %arg8[%c0_19, %c0_20] : memref<256x128xf32, #tpu.memory_space<vmem>>, vector<256x128xf32>
      tpu.vector_store %arg8[%c0_19, %c0_20], %25 {strides = array<i32>} : memref<256x128xf32, #tpu.memory_space<vmem>>, vector<256x128xf32>,
    } else {
    }
    %c0 = arith.constant 0 : index
    %c0_1 = arith.constant 0 : index
    %3 = vector.load %arg2[%c0, %c0_1] : memref<256x128xf32, #tpu.memory_space<vmem>>, vector<256x128xf32>
    %c0_2 = arith.constant 0 : index
    %c0_3 = arith.constant 0 : index
    %4 = vector.load %arg3[%c0_2, %c0_3] : memref<128x128xf32, #tpu.memory_space<vmem>>, vector<128x128xf32>
    %cst = arith.constant dense<0.000000e+00> : vector<256x128xf32>
    %5 = tpu.matmul %3, %4, %cst {dimension_numbers = #tpu.dot_dimension_numbers<[1], [0], [0], [1], [0, 0, 1, 1], [], []>} : vector<256x128xf32>, vector<128x128xf32>, vector<256x128xf32> -> vector<256x128xf32>
    %c0_4 = arith.constant 0 : index
    %c0_5 = arith.constant 0 : index
    %6 = vector.load %arg4[%c0_4, %c0_5] : memref<1x128xf32, #tpu.memory_space<vmem>>, vector<1x128xf32>
    %7 = vector.broadcast %6 : vector<1x128xf32> to vector<256x128xf32>
    %8 = arith.addf %5, %7 : vector<256x128xf32>
    %cst_6 = arith.constant 5.000000e-01 : f32
    %9 = vector.broadcast %cst_6 : f32 to vector<256x128xf32>
    %10 = arith.mulf %9, %8 : vector<256x128xf32>
    %cst_7 = arith.constant 0.707106769 : f32
    %11 = vector.broadcast %cst_7 : f32 to vector<256x128xf32>
    %12 = arith.mulf %8, %11 : vector<256x128xf32>
    %13 = math.erf %12 : vector<256x128xf32>
    %cst_8 = arith.constant 1.000000e+00 : f32
    %14 = vector.broadcast %cst_8 : f32 to vector<256x128xf32>
    %15 = arith.addf %14, %13 : vector<256x128xf32>
    %16 = arith.mulf %10, %15 : vector<256x128xf32>
    %c0_9 = arith.constant 0 : index
    %c0_10 = arith.constant 0 : index
    %17 = vector.load %arg8[%c0_9, %c0_10] : memref<256x128xf32, #tpu.memory_space<vmem>>, vector<256x128xf32>
    %c0_11 = arith.constant 0 : index
    %c0_12 = arith.constant 0 : index
    %18 = vector.load %arg5[%c0_11, %c0_12] : memref<128x128xf32, #tpu.memory_space<vmem>>, vector<128x128xf32>
    %cst_13 = arith.constant dense<0.000000e+00> : vector<256x128xf32>
    %19 = tpu.matmul %16, %18, %cst_13 {dimension_numbers = #tpu.dot_dimension_numbers<[1], [0], [0], [1], [0, 0, 1, 1], [], []>} : vector<256x128xf32>, vector<128x128xf32>, vector<256x128xf32> -> vector<256x128xf32>
    %20 = arith.addf %17, %19 : vector<256x128xf32>
    %c0_14 = arith.constant 0 : index
    %c0_15 = arith.constant 0 : index
    %21 = vector.load %arg8[%c0_14, %c0_15] : memref<256x128xf32, #tpu.memory_space<vmem>>, vector<256x128xf32>
    tpu.vector_store %arg8[%c0_14, %c0_15], %20 {strides = array<i32>} : memref<256x128xf32, #tpu.memory_space<vmem>>, vector<256x128xf32>,
    %c0_i32_16 = arith.constant 0 : i32
    %22 = arith.cmpi eq, %arg1, %c0_i32_16 : i32
    %23 = arith.extui %22 : i1 to i32
    %c0_i32_17 = arith.constant 0 : i32
    %24 = arith.cmpi ne, %23, %c0_i32_17 : i32
    scf.if %24 {
      %c0_18 = arith.constant 0 : index
      %c0_19 = arith.constant 0 : index
      %25 = vector.load %arg8[%c0_18, %c0_19] : memref<256x128xf32, #tpu.memory_space<vmem>>, vector<256x128xf32>
      %c0_20 = arith.constant 0 : index
      %c0_21 = arith.constant 0 : index
      %26 = vector.load %arg6[%c0_20, %c0_21] : memref<1x128xf32, #tpu.memory_space<vmem>>, vector<1x128xf32>
      %27 = vector.broadcast %26 : vector<1x128xf32> to vector<256x128xf32>
      %28 = arith.addf %25, %27 : vector<256x128xf32>
      %c0_22 = arith.constant 0 : index
      %c0_23 = arith.constant 0 : index
      %29 = vector.load %arg7[%c0_22, %c0_23] : memref<256x128xf32, #tpu.memory_space<vmem>>, vector<256x128xf32>
      tpu.vector_store %arg7[%c0_22, %c0_23], %28 {strides = array<i32>} : memref<256x128xf32, #tpu.memory_space<vmem>>, vector<256x128xf32>,
    } else {
    }
    return
  }
  func.func @transform_0(%arg0: i32, %arg1: i32) -> (i32, i32) {
    %c0_i32 = arith.constant 0 : i32
    %c0_i32_0 = arith.constant 0 : i32
    return %arg0, %c0_i32 : i32, i32
  }
  func.func @transform_1(%arg0: i32, %arg1: i32) -> (i32, i32) {
    %c0_i32 = arith.constant 0 : i32
    %c0_i32_0 = arith.constant 0 : i32
    return %c0_i32, %arg1 : i32, i32
  }
  func.func @transform_2(%arg0: i32, %arg1: i32) -> (i32, i32) {
    %c0_i32 = arith.constant 0 : i32
    %c0_i32_0 = arith.constant 0 : i32
    return %c0_i32, %arg1 : i32, i32
  }
  func.func @transform_3(%arg0: i32, %arg1: i32) -> (i32, i32) {
    %c0_i32 = arith.constant 0 : i32
    %c0_i32_0 = arith.constant 0 : i32
    return %arg1, %c0_i32 : i32, i32
  }
  func.func @transform_4(%arg0: i32, %arg1: i32) -> (i32, i32) {
    %c0_i32 = arith.constant 0 : i32
    %c0_i32_0 = arith.constant 0 : i32
    %c0_i32_1 = arith.constant 0 : i32
    return %c0_i32, %c0_i32_0 : i32, i32
  }
  func.func @transform_5(%arg0: i32, %arg1: i32) -> (i32, i32) {
    %c0_i32 = arith.constant 0 : i32
    %c0_i32_0 = arith.constant 0 : i32
    return %arg0, %c0_i32 : i32, i32
  }
}

</mosaic_0001>

<llo_original>
// kernel: mlp_forward.1
$region0: #{mlp_forward.1}
  #allocation0 [shape = 'u32[]', space=smem, size = 0x4, offset = 0x4, fixed_abs, tag = 'smem constant byte address 0x4 - core index']
  #allocation1 [shape = 'u32[144,128]{1,0:T(1,128)}', space=vmem, size = 0x12000, scoped, tag = 'internal scratch']
  #allocation2 [shape = 'f32[256,128]{1,0:T(8,128)}', space=vmem, size = 0x20000, scoped, tag = 'scratch operand']
  %s0 = inlined_call_operand.vmem [shape: f32[512,128], index: 0, kind: input, shape index: {}]
  %s1 = inlined_call_operand.vmem [shape: f32[128,128], index: 1, kind: input, shape index: {}]
  %s2 = inlined_call_operand.vmem [shape: f32[1,128], index: 2, kind: input, shape index: {}]
  %s3 = inlined_call_operand.vmem [shape: f32[128,128], index: 3, kind: input, shape index: {}]
  %s4 = inlined_call_operand.vmem [shape: f32[1,128], index: 4, kind: input, shape index: {}]
  %s5 = inlined_call_operand.vmem [shape: f32[512,128], index: 5, kind: output, shape index: {}]
  %s6 = sld [smem:[#allocation0]]
  $region61: #{mlp_forward.1} parent=0
    _
  %s8 = ssub.s32 1, %s6
  %s9 = scalar_select 0, %s8, %s6
  loop: start=0, step=1, limit=4
  $region2: #{mlp_forward.1} parent=0 // loop_pre_header
    _
  $region3: #{mlp_forward.1} parent=0 // loop_header
    %s11 = sphi 0, %s15
    %p12 = scmp.ge.s32.totalorder %s11, 4
    %s18 = sphi 0, %s30
    %s19 = sphi 0, %s26
    %s20 = sphi 0, %s18
    %s21 = sphi 0, %s19
    %s22 = sphi 0, %s20
    %s23 = sphi 0, %s21
    %s33 = sphi 0, %s35
    %s36 = sphi 0, %s33
    %s37 = sphi 0, %s36
    %s53 = sphi 0, %s37
    %s59 = sphi 0, %s61
    %s62 = sphi 0, %s59
    %s63 = sphi 0, %s62
    %s79 = sphi 0, %s63
    %s85 = sphi 0, %s87
    %s88 = sphi 0, %s85
    %s89 = sphi 0, %s88
    %s105 = sphi 0, %s89
    %s111 = sphi 0, %s113
    %s114 = sphi 0, %s111
    %s115 = sphi 0, %s114
    %s131 = sphi 0, %s115
    %s135 = sphi 0, %s135
    %s137 = sphi 0, %s135
    %s138 = sphi 0, %s137
    %s152 = sphi 0, %s138
    %s158 = sphi 0, %s160
    %s161 = sphi 0, %s158
    %s162 = sphi 0, %s161
    %s178 = sphi 0, %s162
  $region4: #{mlp_forward.1} parent=0 // loop_header_branch
    %14 = sbr.rel (%p12) target = $region8
  $region5: #{mlp_forward.1} parent=0 // loop_body
    %s16 = ssub.s32 %s11, 1
    %s17 = ssub.s32 %s11, 2
    %s24 = sadd.s32 1, %s19
    %p25 = scmp.ge.s32.totalorder %s24, 1
    %s26 = scalar_select %p25, 0, %s24
    %s27 = sadd.s32 1, %s18
    %s28 = scalar_select %p25, %s27, %s18
    %p29 = scmp.ge.s32.totalorder %s28, 2
    %s30 = scalar_select %p29, 0, %s28
    %s31 = ssub.s32 %s18, %s30
    %p32 = scmp.eq.s32.totalorder %s31, 0
    %s34 = sadd.s32 %s33, 1
    %s35 = scalar_select %p32, %s33, %s34
    %p38 = pneg %p32
    %p39 = scmp.eq.s32.totalorder %s11, 1
    %p40 = por %p38, %p39
    %p41 = scmp.ne.s32.totalorder %s33, %s36
    %p42 = scmp.eq.s32.totalorder %s11, 0
    %p43 = por %p41, %p42
    %p44 = scmp.ne.s32.totalorder %s33, %s36
    %p45 = scmp.eq.s32.totalorder %s16, 1
    %p46 = por %p44, %p45
    %p47 = scmp.ne.s32.totalorder %s36, %s37
    %p48 = scmp.eq.s32.totalorder %s16, 0
    %p49 = por %p47, %p48
    %p50 = scmp.ne.s32.totalorder %s36, %s37
    %p51 = scmp.eq.s32.totalorder %s17, 1
    %p52 = por %p50, %p51
    %p54 = scmp.ne.s32.totalorder %s37, %s53
    %p55 = scmp.eq.s32.totalorder %s17, 0
    %p56 = por %p54, %p55
    %s57 = ssub.s32 %s19, %s26
    %p58 = scmp.eq.s32.totalorder %s57, 0
    %s60 = sadd.s32 %s59, 1
    %s61 = scalar_select %p58, %s59, %s60
    %p64 = pneg %p58
    %p65 = scmp.eq.s32.totalorder %s11, 1
    %p66 = por %p64, %p65
    %p67 = scmp.ne.s32.totalorder %s59, %s62
    %p68 = scmp.eq.s32.totalorder %s11, 0
    %p69 = por %p67, %p68
    %p70 = scmp.ne.s32.totalorder %s59, %s62
    %p71 = scmp.eq.s32.totalorder %s16, 1
    %p72 = por %p70, %p71
    %p73 = scmp.ne.s32.totalorder %s62, %s63
    %p74 = scmp.eq.s32.totalorder %s16, 0
    %p75 = por %p73, %p74
    %p76 = scmp.ne.s32.totalorder %s62, %s63
    %p77 = scmp.eq.s32.totalorder %s17, 1
    %p78 = por %p76, %p77
    %p80 = scmp.ne.s32.totalorder %s63, %s79
    %p81 = scmp.eq.s32.totalorder %s17, 0
    %p82 = por %p80, %p81
    %s83 = ssub.s32 %s19, %s26
    %p84 = scmp.eq.s32.totalorder %s83, 0
    %s86 = sadd.s32 %s85, 1
    %s87 = scalar_select %p84, %s85, %s86
    %p90 = pneg %p84
    %p91 = scmp.eq.s32.totalorder %s11, 1
    %p92 = por %p90, %p91
    %p93 = scmp.ne.s32.totalorder %s85, %s88
    %p94 = scmp.eq.s32.totalorder %s11, 0
    %p95 = por %p93, %p94
    %p96 = scmp.ne.s32.totalorder %s85, %s88
    %p97 = scmp.eq.s32.totalorder %s16, 1
    %p98 = por %p96, %p97
    %p99 = scmp.ne.s32.totalorder %s88, %s89
    %p100 = scmp.eq.s32.totalorder %s16, 0
    %p101 = por %p99, %p100
    %p102 = scmp.ne.s32.totalorder %s88, %s89
    %p103 = scmp.eq.s32.totalorder %s17, 1
    %p104 = por %p102, %p103
    %p106 = scmp.ne.s32.totalorder %s89, %s105
    %p107 = scmp.eq.s32.totalorder %s17, 0
    %p108 = por %p106, %p107
    %s109 = ssub.s32 %s19, %s26
    %p110 = scmp.eq.s32.totalorder %s109, 0
    %s112 = sadd.s32 %s111, 1
    %s113 = scalar_select %p110, %s111, %s112
    %p116 = pneg %p110
    %p117 = scmp.eq.s32.totalorder %s11, 1
    %p118 = por %p116, %p117
    %p119 = scmp.ne.s32.totalorder %s111, %s114
    %p120 = scmp.eq.s32.totalorder %s11, 0
    %p121 = por %p119, %p120
    %p122 = scmp.ne.s32.totalorder %s111, %s114
    %p123 = scmp.eq.s32.totalorder %s16, 1
    %p124 = por %p122, %p123
    %p125 = scmp.ne.s32.totalorder %s114, %s115
    %p126 = scmp.eq.s32.totalorder %s16, 0
    %p127 = por %p125, %p126
    %p128 = scmp.ne.s32.totalorder %s114, %s115
    %p129 = scmp.eq.s32.totalorder %s17, 1
    %p130 = por %p128, %p129
    %p132 = scmp.ne.s32.totalorder %s115, %s131
    %p133 = scmp.eq.s32.totalorder %s17, 0
    %p134 = por %p132, %p133
    %s136 = sadd.s32 %s135, 1
    %p139 = scmp.eq.s32.totalorder %s11, 1
    %p140 = scmp.ne.s32.totalorder %s135, %s137
    %p141 = scmp.eq.s32.totalorder %s11, 0
    %p142 = por %p140, %p141
    %p143 = scmp.ne.s32.totalorder %s135, %s137
    %p144 = scmp.eq.s32.totalorder %s16, 1
    %p145 = por %p143, %p144
    %p146 = scmp.ne.s32.totalorder %s137, %s138
    %p147 = scmp.eq.s32.totalorder %s16, 0
    %p148 = por %p146, %p147
    %p149 = scmp.ne.s32.totalorder %s137, %s138
    %p150 = scmp.eq.s32.totalorder %s17, 1
    %p151 = por %p149, %p150
    %p153 = scmp.ne.s32.totalorder %s138, %s152
    %p154 = scmp.eq.s32.totalorder %s17, 0
    %p155 = por %p153, %p154
    %s156 = ssub.s32 %s18, %s30
    %p157 = scmp.eq.s32.totalorder %s156, 0
    %s159 = sadd.s32 %s158, 1
    %s160 = scalar_select %p157, %s158, %s159
    %p163 = pneg %p157
    %p164 = scmp.eq.s32.totalorder %s11, 1
    %p165 = por %p163, %p164
    %p166 = scmp.ne.s32.totalorder %s158, %s161
    %p167 = scmp.eq.s32.totalorder %s11, 0
    %p168 = por %p166, %p167
    %p169 = scmp.ne.s32.totalorder %s158, %s161
    %p170 = scmp.eq.s32.totalorder %s16, 1
    %p171 = por %p169, %p170
    %p172 = scmp.ne.s32.totalorder %s161, %s162
    %p173 = scmp.eq.s32.totalorder %s16, 0
    %p174 = por %p172, %p173
    %p175 = scmp.ne.s32.totalorder %s161, %s162
    %p176 = scmp.eq.s32.totalorder %s17, 1
    %p177 = por %p175, %p176
    %p179 = scmp.ne.s32.totalorder %s162, %s178
    %p180 = scmp.eq.s32.totalorder %s17, 0
    %p181 = por %p179, %p180
    %p182 = scmp.le.s32.totalorder 1, %s11
    %p183 = scmp.lt.s32.totalorder %s11, 3
    %p184 = pnand %p182, %p183
    %p185 = pneg %p184
    // Predicated region
    $region9: #{mlp_forward.1} parent=5 // pred_check
      _
    $region10: #{mlp_forward.1} parent=5 // pred_check_branch
      %187 = sbr.rel (%p184) target = $region12
    $region11: #{mlp_forward.1} parent=5 // pred_region
      %s188 = ssub.s32 %s11, 1
      // Predicated region
      $region13: #{mlp_forward.1} parent=11 // pred_check
        %p189 = pneg %p75
      $region14: #{mlp_forward.1} parent=11 // pred_check_branch
        %191 = sbr.rel (%p189) target = $region16
      $region15: #{mlp_forward.1} parent=11 // pred_region
        %p192 = scmp.lt.s32.totalorder %s21, 0
        %s193 = scalar_select %p192, %s21, 0
        %s194 = smul.addr %s193, 8
        %s195 = scalar_lea.vmem %s1, %s194
      $region16: #{mlp_forward.1} parent=11 // pred_fallthru
        _
      // Predicated region
      $region17: #{mlp_forward.1} parent=11 // pred_check
        %p196 = pneg %p101
      $region18: #{mlp_forward.1} parent=11 // pred_check_branch
        %198 = sbr.rel (%p196) target = $region20
      $region19: #{mlp_forward.1} parent=11 // pred_region
        %p199 = scmp.lt.s32.totalorder %s21, 0
        %s200 = scalar_select %p199, %s21, 0
        %s201 = scalar_lea.vmem %s2, %s200
      $region20: #{mlp_forward.1} parent=11 // pred_fallthru
        _
      // Predicated region
      $region21: #{mlp_forward.1} parent=11 // pred_check
        %p202 = pneg %p127
      $region22: #{mlp_forward.1} parent=11 // pred_check_branch
        %204 = sbr.rel (%p202) target = $region24
      $region23: #{mlp_forward.1} parent=11 // pred_region
        %s205 = smul.u32 16, %s21
        %p206 = scmp.lt.s32.totalorder %s205, 15
        %s207 = scalar_select %p206, %s205, 15
        %s208 = smul.addr %s207, 8
        %s209 = scalar_lea.vmem %s3, %s208
        %s210 = smul.u32 16, %s21
      $region24: #{mlp_forward.1} parent=11 // pred_fallthru
        _
      // Predicated region
      $region25: #{mlp_forward.1} parent=11 // pred_check
        %p211 = pneg %p148
      $region26: #{mlp_forward.1} parent=11 // pred_check_branch
        %213 = sbr.rel (%p211) target = $region28
      $region27: #{mlp_forward.1} parent=11 // pred_region
        _
      $region28: #{mlp_forward.1} parent=11 // pred_fallthru
        _
    $region12: #{mlp_forward.1} parent=5 // pred_fallthru
      _
    %p214 = scmp.lt.s32.totalorder %s11, 2
    // Predicated region
    $region29: #{mlp_forward.1} parent=5 // pred_check
      %p215 = pneg %p214
    $region30: #{mlp_forward.1} parent=5 // pred_check_branch
      %217 = sbr.rel (%p215) target = $region32
    $region31: #{mlp_forward.1} parent=5 // pred_region
      // Predicated region
      $region33: #{mlp_forward.1} parent=31 // pred_check
        %p218 = pneg %p43
      $region34: #{mlp_forward.1} parent=31 // pred_check_branch
        %220 = sbr.rel (%p218) target = $region36
      $region35: #{mlp_forward.1} parent=31 // pred_region
        %s221 = smul.u32 32, %s18
        %p222 = scmp.lt.s32.totalorder %s221, 63
        %s223 = scalar_select %p222, %s221, 63
        %s224 = smul.addr %s223, 8
        %s225 = scalar_lea.vmem %s0, %s224
        %s226 = smul.u32 32, %s18
      $region36: #{mlp_forward.1} parent=31 // pred_fallthru
        _
    $region32: #{mlp_forward.1} parent=5 // pred_fallthru
      _
    %p227 = scmp.le.s32.totalorder 1, %s11
    %p228 = scmp.lt.s32.totalorder %s11, 3
    %p229 = pnand %p227, %p228
    %p230 = pneg %p229
    // Predicated region
    $region37: #{mlp_forward.1} parent=5 // pred_check
      _
    $region38: #{mlp_forward.1} parent=5 // pred_check_branch
      %232 = sbr.rel (%p229) target = $region40
    $region39: #{mlp_forward.1} parent=5 // pred_region
      %s233 = ssub.s32 %s11, 1
      %s234 = smul.u32 32, %s20
      %p235 = scmp.lt.s32.totalorder %s234, 63
      %s236 = scalar_select %p235, %s234, 63
      %s237 = smul.addr %s236, 8
      %s238 = scalar_lea.vmem %s0, %s237
      %p239 = pneg %p49
      %p240 = pneg %p46
      %p241 = scmp.lt.s32.totalorder %s21, 0
      %s242 = scalar_select %p241, %s21, 0
      %s243 = smul.addr %s242, 8
      %s244 = scalar_lea.vmem %s1, %s243
      %p245 = pneg %p75
      %p246 = pneg %p72
      %p247 = scmp.lt.s32.totalorder %s21, 0
      %s248 = scalar_select %p247, %s21, 0
      %s249 = scalar_lea.vmem %s2, %s248
      %p250 = pneg %p101
      %p251 = pneg %p98
      %s252 = smul.u32 16, %s21
      %p253 = scmp.lt.s32.totalorder %s252, 15
      %s254 = scalar_select %p253, %s252, 15
      %s255 = smul.addr %s254, 8
      %s256 = scalar_lea.vmem %s3, %s255
      %p257 = pneg %p127
      %p258 = pneg %p124
      %p259 = pneg %p148
      %p260 = pneg %p145
      %p261 = pneg %p174
      %p262 = pneg %p171
      %s263 = smul.u32 32, %s20
      %p264 = scmp.lt.s32.totalorder %s263, 63
      %s265 = scalar_select %p264, %s263, 63
      %s266 = smul.addr %s265, 8
      %s267 = scalar_lea.vmem %s5, %s266
      %s268 = smul.u32 32, %s20
      %p269 = scmp.lt.s32.totalorder %s268, 63
      %s270 = scalar_select %p269, %s268, 63
      %s271 = smul.addr %s270, 8
      %s272 = scalar_lea.vmem %s0, %s271
      %s273 = smul.u32 32, %s20
      %p274 = scmp.lt.s32.totalorder %s21, 0
      %s275 = scalar_select %p274, %s21, 0
      %s276 = smul.addr %s275, 8
      %s277 = scalar_lea.vmem %s1, %s276
      %p278 = scmp.lt.s32.totalorder %s21, 0
      %s279 = scalar_select %p278, %s21, 0
      %s280 = scalar_lea.vmem %s2, %s279
      %s281 = smul.u32 16, %s21
      %p282 = scmp.lt.s32.totalorder %s281, 15
      %s283 = scalar_select %p282, %s281, 15
      %s284 = smul.addr %s283, 8
      %s285 = scalar_lea.vmem %s3, %s284
      %s286 = smul.u32 16, %s21
      %s287 = smul.u32 32, %s20
      %p288 = scmp.lt.s32.totalorder %s287, 63
      %s289 = scalar_select %p288, %s287, 63
      %s290 = smul.addr %s289, 8
      %s291 = scalar_lea.vmem %s5, %s290
      %s292 = smul.u32 32, %s20
      %p293 = scmp.eq.s32.totalorder %s21, 0
      // Predicated region
      $region41: #{mlp_forward.1} parent=39 // pred_check
        %p294 = pneg %p293
      $region42: #{mlp_forward.1} parent=39 // pred_check_branch
        %296 = sbr.rel (%p294) target = $region44
      $region43: #{mlp_forward.1} parent=39 // pred_region
        %297 = vst [vmem:[#allocation2] sm:$0xff] 0.0
        %298 = vst [vmem:[#allocation2 + $0x8] sm:$0xff] 0.0
        %299 = vst [vmem:[#allocation2 + $0x10] sm:$0xff] 0.0
        %300 = vst [vmem:[#allocation2 + $0x18] sm:$0xff] 0.0
        %301 = vst [vmem:[#allocation2 + $0x20] sm:$0xff] 0.0
        %302 = vst [vmem:[#allocation2 + $0x28] sm:$0xff] 0.0
        %303 = vst [vmem:[#allocation2 + $0x30] sm:$0xff] 0.0
        %304 = vst [vmem:[#allocation2 + $0x38] sm:$0xff] 0.0
        %305 = vst [vmem:[#allocation2 + $0x40] sm:$0xff] 0.0
        %306 = vst [vmem:[#allocation2 + $0x48] sm:$0xff] 0.0
        %307 = vst [vmem:[#allocation2 + $0x50] sm:$0xff] 0.0
        %308 = vst [vmem:[#allocation2 + $0x58] sm:$0xff] 0.0
        %309 = vst [vmem:[#allocation2 + $0x60] sm:$0xff] 0.0
        %310 = vst [vmem:[#allocation2 + $0x68] sm:$0xff] 0.0
        %311 = vst [vmem:[#allocation2 + $0x70] sm:$0xff] 0.0
        %312 = vst [vmem:[#allocation2 + $0x78] sm:$0xff] 0.0
        %313 = vst [vmem:[#allocation2 + $0x80] sm:$0xff] 0.0
        %314 = vst [vmem:[#allocation2 + $0x88] sm:$0xff] 0.0
        %315 = vst [vmem:[#allocation2 + $0x90] sm:$0xff] 0.0
        %316 = vst [vmem:[#allocation2 + $0x98] sm:$0xff] 0.0
        %317 = vst [vmem:[#allocation2 + $0xa0] sm:$0xff] 0.0
        %318 = vst [vmem:[#allocation2 + $0xa8] sm:$0xff] 0.0
        %319 = vst [vmem:[#allocation2 + $0xb0] sm:$0xff] 0.0
        %320 = vst [vmem:[#allocation2 + $0xb8] sm:$0xff] 0.0
        %321 = vst [vmem:[#allocation2 + $0xc0] sm:$0xff] 0.0
        %322 = vst [vmem:[#allocation2 + $0xc8] sm:$0xff] 0.0
        %323 = vst [vmem:[#allocation2 + $0xd0] sm:$0xff] 0.0
        %324 = vst [vmem:[#allocation2 + $0xd8] sm:$0xff] 0.0
        %325 = vst [vmem:[#allocation2 + $0xe0] sm:$0xff] 0.0
        %326 = vst [vmem:[#allocation2 + $0xe8] sm:$0xff] 0.0
        %327 = vst [vmem:[#allocation2 + $0xf0] sm:$0xff] 0.0
        %328 = vst [vmem:[#allocation2 + $0xf8] sm:$0xff] 0.0
      $region44: #{mlp_forward.1} parent=39 // pred_fallthru
        _
      %v329 = vld [vmem:[%s272] sm:$0xff]
      %v330 = vld [vmem:[%s272 + $0x8] sm:$0xff]
      %v331 = vld [vmem:[%s272 + $0x10] sm:$0xff]
      %v332 = vld [vmem:[%s272 + $0x18] sm:$0xff]
      %v333 = vld [vmem:[%s272 + $0x20] sm:$0xff]
      %v334 = vld [vmem:[%s272 + $0x28] sm:$0xff]
      %v335 = vld [vmem:[%s272 + $0x30] sm:$0xff]
      %v336 = vld [vmem:[%s272 + $0x38] sm:$0xff]
      %v337 = vld [vmem:[%s272 + $0x40] sm:$0xff]
      %v338 = vld [vmem:[%s272 + $0x48] sm:$0xff]
      %v339 = vld [vmem:[%s272 + $0x50] sm:$0xff]
      %v340 = vld [vmem:[%s272 + $0x58] sm:$0xff]
      %v341 = vld [vmem:[%s272 + $0x60] sm:$0xff]
      %v342 = vld [vmem:[%s272 + $0x68] sm:$0xff]
      %v343 = vld [vmem:[%s272 + $0x70] sm:$0xff]
      %v344 = vld [vmem:[%s272 + $0x78] sm:$0xff]
      %v345 = vld [vmem:[%s272 + $0x80] sm:$0xff]
      %v346 = vld [vmem:[%s272 + $0x88] sm:$0xff]
      %v347 = vld [vmem:[%s272 + $0x90] sm:$0xff]
      %v348 = vld [vmem:[%s272 + $0x98] sm:$0xff]
      %v349 = vld [vmem:[%s272 + $0xa0] sm:$0xff]
      %v350 = vld [vmem:[%s272 + $0xa8] sm:$0xff]
      %v351 = vld [vmem:[%s272 + $0xb0] sm:$0xff]
      %v352 = vld [vmem:[%s272 + $0xb8] sm:$0xff]
      %v353 = vld [vmem:[%s272 + $0xc0] sm:$0xff]
      %v354 = vld [vmem:[%s272 + $0xc8] sm:$0xff]
      %v355 = vld [vmem:[%s272 + $0xd0] sm:$0xff]
      %v356 = vld [vmem:[%s272 + $0xd8] sm:$0xff]
      %v357 = vld [vmem:[%s272 + $0xe0] sm:$0xff]
      %v358 = vld [vmem:[%s272 + $0xe8] sm:$0xff]
      %v359 = vld [vmem:[%s272 + $0xf0] sm:$0xff]
      %v360 = vld [vmem:[%s272 + $0xf8] sm:$0xff]
      %v361 = vld [vmem:[%s277] sm:$0xff]
      %v362 = vld [vmem:[%s277 + $0x8] sm:$0xff]
      %v363 = vld [vmem:[%s277 + $0x10] sm:$0xff]
      %v364 = vld [vmem:[%s277 + $0x18] sm:$0xff]
      %v365 = vld [vmem:[%s277 + $0x20] sm:$0xff]
      %v366 = vld [vmem:[%s277 + $0x28] sm:$0xff]
      %v367 = vld [vmem:[%s277 + $0x30] sm:$0xff]
      %v368 = vld [vmem:[%s277 + $0x38] sm:$0xff]
      %v369 = vld [vmem:[%s277 + $0x40] sm:$0xff]
      %v370 = vld [vmem:[%s277 + $0x48] sm:$0xff]
      %v371 = vld [vmem:[%s277 + $0x50] sm:$0xff]
      %v372 = vld [vmem:[%s277 + $0x58] sm:$0xff]
      %v373 = vld [vmem:[%s277 + $0x60] sm:$0xff]
      %v374 = vld [vmem:[%s277 + $0x68] sm:$0xff]
      %v375 = vld [vmem:[%s277 + $0x70] sm:$0xff]
      %v376 = vld [vmem:[%s277 + $0x78] sm:$0xff]
      %v377 = vld [vmem:[%s280] sm:$0x1]
      %v379 = vlaneseq
      %v380 = vshrl.u32 %v379, 7
      %v381 = vsub.s32 0, %v380
      %v382 = vrot.slane %v377, %v381
      %384 = vmatprep.subr.mxu0 0.0
      %385 = vmatpush1.msra.mxu0 %v361
      %386 = vmatprep.subr.mxu0 0.0
      %387 = vmatpush1.msra.mxu0 %v362
      %388 = vmatprep.subr.mxu0 0.0
      %389 = vmatpush1.msra.mxu0 %v363
      %390 = vmatprep.subr.mxu0 0.0
      %391 = vmatpush1.msra.mxu0 %v364
      %392 = vmatprep.subr.mxu0 0.0
      %393 = vmatpush1.msra.mxu0 %v365
      %394 = vmatprep.subr.mxu0 0.0
      %395 = vmatpush1.msra.mxu0 %v366
      %396 = vmatprep.subr.mxu0 0.0
      %397 = vmatpush1.msra.mxu0 %v367
      %398 = vmatprep.subr.mxu0 0.0
      %399 = vmatpush1.msra.mxu0 %v368
      %400 = vmatprep.subr.mxu0 0.0
      %401 = vmatpush1.msra.mxu0 %v369
      %402 = vmatprep.subr.mxu0 0.0
      %403 = vmatpush1.msra.mxu0 %v370
      %404 = vmatprep.subr.mxu0 0.0
      %405 = vmatpush1.msra.mxu0 %v371
      %406 = vmatprep.subr.mxu0 0.0
      %407 = vmatpush1.msra.mxu0 %v372
      %408 = vmatprep.subr.mxu0 0.0
      %409 = vmatpush1.msra.mxu0 %v373
      %410 = vmatprep.subr.mxu0 0.0
      %411 = vmatpush1.msra.mxu0 %v374
      %412 = vmatprep.subr.mxu0 0.0
      %413 = vmatpush1.msra.mxu0 %v375
      %414 = vmatprep.subr.mxu0 0.0
      %415 = vmatpush1.msra.mxu0 %v376
      %416 = vmatprep.subr.mxu0 0.0
      %417 = vmatpush1.msra.mxu0 0.0
      %418 = vmatprep.subr.mxu0 0.0
      %419 = vmatpush1.msra.mxu0 0.0
      %420 = vmatprep.subr.mxu0 0.0
      %421 = vmatpush1.msra.mxu0 0.0
      %422 = vmatprep.subr.mxu0 0.0
      %423 = vmatpush1.msra.mxu0 0.0
      %424 = vmatprep.subr.mxu0 0.0
      %425 = vmatpush1.msra.mxu0 0.0
      %426 = vmatprep.subr.mxu0 0.0
      %427 = vmatpush1.msra.mxu0 0.0
      %428 = vmatprep.subr.mxu0 0.0
      %429 = vmatpush1.msra.mxu0 0.0
      %430 = vmatprep.subr.mxu0 0.0
      %431 = vmatpush1.msra.mxu0 0.0
      %432 = vmatprep.subr.mxu0 0.0
      %433 = vmatpush1.msra.mxu0 0.0
      %434 = vmatprep.subr.mxu0 0.0
      %435 = vmatpush1.msra.mxu0 0.0
      %436 = vmatprep.subr.mxu0 0.0
      %437 = vmatpush1.msra.mxu0 0.0
      %438 = vmatprep.subr.mxu0 0.0
      %439 = vmatpush1.msra.mxu0 0.0
      %440 = vmatprep.subr.mxu0 0.0
      %441 = vmatpush1.msra.mxu0 0.0
      %442 = vmatprep.subr.mxu0 0.0
      %443 = vmatpush1.msra.mxu0 0.0
      %444 = vmatprep.subr.mxu0 0.0
      %445 = vmatpush1.msra.mxu0 0.0
      %446 = vmatprep.subr.mxu0 0.0
      %447 = vmatpush1.msra.mxu0 0.0
      %448 = vmatprep.mubr.f32.mxu0 0.0
      %449 = vmatmul.mubr.f32.gmra.mrb[0].mxu0 %v329
      %v450 = vpop.f32.mrb[0].mxu0
      %v451 = vadd.f32 %v382, %v450
      %v452 = vpop.f32.mrb[0].mxu0
      %453 = vmatprep.mubr.f32.mxu0 0.0
      %454 = vmatmul.mubr.f32.gmra.mrb[0].mxu0 %v330
      %v455 = vpop.f32.mrb[0].mxu0
      %v456 = vadd.f32 %v382, %v455
      %v457 = vpop.f32.mrb[0].mxu0
      %458 = vmatprep.mubr.f32.mxu0 0.0
      %459 = vmatmul.mubr.f32.gmra.mrb[0].mxu0 %v331
      %v460 = vpop.f32.mrb[0].mxu0
      %v461 = vadd.f32 %v382, %v460
      %v462 = vpop.f32.mrb[0].mxu0
      %463 = vmatprep.mubr.f32.mxu0 0.0
      %464 = vmatmul.mubr.f32.gmra.mrb[0].mxu0 %v332
      %v465 = vpop.f32.mrb[0].mxu0
      %v466 = vadd.f32 %v382, %v465
      %v467 = vpop.f32.mrb[0].mxu0
      %468 = vmatprep.mubr.f32.mxu0 0.0
      %469 = vmatmul.mubr.f32.gmra.mrb[0].mxu0 %v333
      %v470 = vpop.f32.mrb[0].mxu0
      %v471 = vadd.f32 %v382, %v470
      %v472 = vpop.f32.mrb[0].mxu0
      %473 = vmatprep.mubr.f32.mxu0 0.0
      %474 = vmatmul.mubr.f32.gmra.mrb[0].mxu0 %v334
      %v475 = vpop.f32.mrb[0].mxu0
      %v476 = vadd.f32 %v382, %v475
      %v477 = vpop.f32.mrb[0].mxu0
      %478 = vmatprep.mubr.f32.mxu0 0.0
      %479 = vmatmul.mubr.f32.gmra.mrb[0].mxu0 %v335
      %v480 = vpop.f32.mrb[0].mxu0
      %v481 = vadd.f32 %v382, %v480
      %v482 = vpop.f32.mrb[0].mxu0
      %483 = vmatprep.mubr.f32.mxu0 0.0
      %484 = vmatmul.mubr.f32.gmra.mrb[0].mxu0 %v336
      %v485 = vpop.f32.mrb[0].mxu0
      %v486 = vadd.f32 %v382, %v485
      %v487 = vpop.f32.mrb[0].mxu0
      %488 = vmatprep.mubr.f32.mxu0 0.0
      %489 = vmatmul.mubr.f32.gmra.mrb[0].mxu0 %v337
      %v490 = vpop.f32.mrb[0].mxu0
      %v491 = vadd.f32 %v382, %v490
      %v492 = vpop.f32.mrb[0].mxu0
      %493 = vmatprep.mubr.f32.mxu0 0.0
      %494 = vmatmul.mubr.f32.gmra.mrb[0].mxu0 %v338
      %v495 = vpop.f32.mrb[0].mxu0
      %v496 = vadd.f32 %v382, %v495
      %v497 = vpop.f32.mrb[0].mxu0
      %498 = vmatprep.mubr.f32.mxu0 0.0
      %499 = vmatmul.mubr.f32.gmra.mrb[0].mxu0 %v339
      %v500 = vpop.f32.mrb[0].mxu0
      %v501 = vadd.f32 %v382, %v500
      %v502 = vpop.f32.mrb[0].mxu0
      %503 = vmatprep.mubr.f32.mxu0 0.0
      %504 = vmatmul.mubr.f32.gmra.mrb[0].mxu0 %v340
      %v505 = vpop.f32.mrb[0].mxu0
      %v506 = vadd.f32 %v382, %v505
      %v507 = vpop.f32.mrb[0].mxu0
      %508 = vmatprep.mubr.f32.mxu0 0.0
      %509 = vmatmul.mubr.f32.gmra.mrb[0].mxu0 %v341
      %v510 = vpop.f32.mrb[0].mxu0
      %v511 = vadd.f32 %v382, %v510
      %v512 = vpop.f32.mrb[0].mxu0
      %513 = vmatprep.mubr.f32.mxu0 0.0
      %514 = vmatmul.mubr.f32.gmra.mrb[0].mxu0 %v342
      %v515 = vpop.f32.mrb[0].mxu0
      %v516 = vadd.f32 %v382, %v515
      %v517 = vpop.f32.mrb[0].mxu0
      %518 = vmatprep.mubr.f32.mxu0 0.0
      %519 = vmatmul.mubr.f32.gmra.mrb[0].mxu0 %v343
      %v520 = vpop.f32.mrb[0].mxu0
      %v521 = vadd.f32 %v382, %v520
      %v522 = vpop.f32.mrb[0].mxu0
      %523 = vmatprep.mubr.f32.mxu0 0.0
      %524 = vmatmul.mubr.f32.gmra.mrb[0].mxu0 %v344
      %v525 = vpop.f32.mrb[0].mxu0
      %v526 = vadd.f32 %v382, %v525
      %v527 = vpop.f32.mrb[0].mxu0
      %528 = vmatprep.mubr.f32.mxu0 0.0
      %529 = vmatmul.mubr.f32.gmra.mrb[0].mxu0 %v345
      %v530 = vpop.f32.mrb[0].mxu0
      %v531 = vadd.f32 %v382, %v530
      %v532 = vpop.f32.mrb[0].mxu0
      %533 = vmatprep.mubr.f32.mxu0 0.0
      %534 = vmatmul.mubr.f32.gmra.mrb[0].mxu0 %v346
      %v535 = vpop.f32.mrb[0].mxu0
      %v536 = vadd.f32 %v382, %v535
      %v537 = vpop.f32.mrb[0].mxu0
      %538 = vmatprep.mubr.f32.mxu0 0.0
      %539 = vmatmul.mubr.f32.gmra.mrb[0].mxu0 %v347
      %v540 = vpop.f32.mrb[0].mxu0
      %v541 = vadd.f32 %v382, %v540
      %v542 = vpop.f32.mrb[0].mxu0
      %543 = vmatprep.mubr.f32.mxu0 0.0
      %544 = vmatmul.mubr.f32.gmra.mrb[0].mxu0 %v348
      %v545 = vpop.f32.mrb[0].mxu0
      %v546 = vadd.f32 %v382, %v545
      %v547 = vpop.f32.mrb[0].mxu0
      %548 = vmatprep.mubr.f32.mxu0 0.0
      %549 = vmatmul.mubr.f32.gmra.mrb[0].mxu0 %v349
      %v550 = vpop.f32.mrb[0].mxu0
      %v551 = vadd.f32 %v382, %v550
      %v552 = vpop.f32.mrb[0].mxu0
      %553 = vmatprep.mubr.f32.mxu0 0.0
      %554 = vmatmul.mubr.f32.gmra.mrb[0].mxu0 %v350
      %v555 = vpop.f32.mrb[0].mxu0
      %v556 = vadd.f32 %v382, %v555
      %v557 = vpop.f32.mrb[0].mxu0
      %558 = vmatprep.mubr.f32.mxu0 0.0
      %559 = vmatmul.mubr.f32.gmra.mrb[0].mxu0 %v351
      %v560 = vpop.f32.mrb[0].mxu0
      %v561 = vadd.f32 %v382, %v560
      %v562 = vpop.f32.mrb[0].mxu0
      %563 = vmatprep.mubr.f32.mxu0 0.0
      %564 = vmatmul.mubr.f32.gmra.mrb[0].mxu0 %v352
      %v565 = vpop.f32.mrb[0].mxu0
      %v566 = vadd.f32 %v382, %v565
      %v567 = vpop.f32.mrb[0].mxu0
      %568 = vmatprep.mubr.f32.mxu0 0.0
      %569 = vmatmul.mubr.f32.gmra.mrb[0].mxu0 %v353
      %v570 = vpop.f32.mrb[0].mxu0
      %v571 = vadd.f32 %v382, %v570
      %v572 = vpop.f32.mrb[0].mxu0
      %573 = vmatprep.mubr.f32.mxu0 0.0
      %574 = vmatmul.mubr.f32.gmra.mrb[0].mxu0 %v354
      %v575 = vpop.f32.mrb[0].mxu0
      %v576 = vadd.f32 %v382, %v575
      %v577 = vpop.f32.mrb[0].mxu0
      %578 = vmatprep.mubr.f32.mxu0 0.0
      %579 = vmatmul.mubr.f32.gmra.mrb[0].mxu0 %v355
      %v580 = vpop.f32.mrb[0].mxu0
      %v581 = vadd.f32 %v382, %v580
      %v582 = vpop.f32.mrb[0].mxu0
      %583 = vmatprep.mubr.f32.mxu0 0.0
      %584 = vmatmul.mubr.f32.gmra.mrb[0].mxu0 %v356
      %v585 = vpop.f32.mrb[0].mxu0
      %v586 = vadd.f32 %v382, %v585
      %v587 = vpop.f32.mrb[0].mxu0
      %588 = vmatprep.mubr.f32.mxu0 0.0
      %589 = vmatmul.mubr.f32.gmra.mrb[0].mxu0 %v357
      %v590 = vpop.f32.mrb[0].mxu0
      %v591 = vadd.f32 %v382, %v590
      %v592 = vpop.f32.mrb[0].mxu0
      %593 = vmatprep.mubr.f32.mxu0 0.0
      %594 = vmatmul.mubr.f32.gmra.mrb[0].mxu0 %v358
      %v595 = vpop.f32.mrb[0].mxu0
      %v596 = vadd.f32 %v382, %v595
      %v597 = vpop.f32.mrb[0].mxu0
      %598 = vmatprep.mubr.f32.mxu0 0.0
      %599 = vmatmul.mubr.f32.gmra.mrb[0].mxu0 %v359
      %v600 = vpop.f32.mrb[0].mxu0
      %v601 = vadd.f32 %v382, %v600
      %v602 = vpop.f32.mrb[0].mxu0
      %603 = vmatprep.mubr.f32.mxu0 0.0
      %604 = vmatmul.mubr.f32.gmra.mrb[0].mxu0 %v360
      %v605 = vpop.f32.mrb[0].mxu0
      %v606 = vadd.f32 %v382, %v605
      %v607 = vpop.f32.mrb[0].mxu0
      %608 = vdwg.mxu0
      %v609 = vmul.f32 %v451, 0.5
      %v610 = vmul.f32 %v456, 0.5
      %v611 = vmul.f32 %v461, 0.5
      %v612 = vmul.f32 %v466, 0.5
      %v613 = vmul.f32 %v471, 0.5
      %v614 = vmul.f32 %v476, 0.5
      %v615 = vmul.f32 %v481, 0.5
      %v616 = vmul.f32 %v486, 0.5
      %v617 = vmul.f32 %v491, 0.5
      %v618 = vmul.f32 %v496, 0.5
      %v619 = vmul.f32 %v501, 0.5
      %v620 = vmul.f32 %v506, 0.5
      %v621 = vmul.f32 %v511, 0.5
      %v622 = vmul.f32 %v516, 0.5
      %v623 = vmul.f32 %v521, 0.5
      %v624 = vmul.f32 %v526, 0.5
      %v625 = vmul.f32 %v531, 0.5
      %v626 = vmul.f32 %v536, 0.5
      %v627 = vmul.f32 %v541, 0.5
      %v628 = vmul.f32 %v546, 0.5
      %v629 = vmul.f32 %v551, 0.5
      %v630 = vmul.f32 %v556, 0.5
      %v631 = vmul.f32 %v561, 0.5
      %v632 = vmul.f32 %v566, 0.5
      %v633 = vmul.f32 %v571, 0.5
      %v634 = vmul.f32 %v576, 0.5
      %v635 = vmul.f32 %v581, 0.5
      %v636 = vmul.f32 %v586, 0.5
      %v637 = vmul.f32 %v591, 0.5
      %v638 = vmul.f32 %v596, 0.5
      %v639 = vmul.f32 %v601, 0.5
      %v640 = vmul.f32 %v606, 0.5
      %v641 = vmul.f32 %v451, 0.70710677
      %v642 = vmul.f32 %v456, 0.70710677
      %v643 = vmul.f32 %v461, 0.70710677
      %v644 = vmul.f32 %v466, 0.70710677
      %v645 = vmul.f32 %v471, 0.70710677
      %v646 = vmul.f32 %v476, 0.70710677
      %v647 = vmul.f32 %v481, 0.70710677
      %v648 = vmul.f32 %v486, 0.70710677
      %v649 = vmul.f32 %v491, 0.70710677
      %v650 = vmul.f32 %v496, 0.70710677
      %v651 = vmul.f32 %v501, 0.70710677
      %v652 = vmul.f32 %v506, 0.70710677
      %v653 = vmul.f32 %v511, 0.70710677
      %v654 = vmul.f32 %v516, 0.70710677
      %v655 = vmul.f32 %v521, 0.70710677
      %v656 = vmul.f32 %v526, 0.70710677
      %v657 = vmul.f32 %v531, 0.70710677
      %v658 = vmul.f32 %v536, 0.70710677
      %v659 = vmul.f32 %v541, 0.70710677
      %v660 = vmul.f32 %v546, 0.70710677
      %v661 = vmul.f32 %v551, 0.70710677
      %v662 = vmul.f32 %v556, 0.70710677
      %v663 = vmul.f32 %v561, 0.70710677
      %v664 = vmul.f32 %v566, 0.70710677
      %v665 = vmul.f32 %v571, 0.70710677
      %v666 = vmul.f32 %v576, 0.70710677
      %v667 = vmul.f32 %v581, 0.70710677
      %v668 = vmul.f32 %v586, 0.70710677
      %v669 = vmul.f32 %v591, 0.70710677
      %v670 = vmul.f32 %v596, 0.70710677
      %v671 = vmul.f32 %v601, 0.70710677
      %v672 = vmul.f32 %v606, 0.70710677
      %v673 = verf.f32.pop %v641
      %v674 = verf.f32.pop %v642
      %v675 = verf.f32.pop %v643
      %v676 = verf.f32.pop %v644
      %v677 = verf.f32.pop %v645
      %v678 = verf.f32.pop %v646
      %v679 = verf.f32.pop %v647
      %v680 = verf.f32.pop %v648
      %v681 = verf.f32.pop %v649
      %v682 = verf.f32.pop %v650
      %v683 = verf.f32.pop %v651
      %v684 = verf.f32.pop %v652
      %v685 = verf.f32.pop %v653
      %v686 = verf.f32.pop %v654
      %v687 = verf.f32.pop %v655
      %v688 = verf.f32.pop %v656
      %v689 = verf.f32.pop %v657
      %v690 = verf.f32.pop %v658
      %v691 = verf.f32.pop %v659
      %v692 = verf.f32.pop %v660
      %v693 = verf.f32.pop %v661
      %v694 = verf.f32.pop %v662
      %v695 = verf.f32.pop %v663
      %v696 = verf.f32.pop %v664
      %v697 = verf.f32.pop %v665
      %v698 = verf.f32.pop %v666
      %v699 = verf.f32.pop %v667
      %v700 = verf.f32.pop %v668
      %v701 = verf.f32.pop %v669
      %v702 = verf.f32.pop %v670
      %v703 = verf.f32.pop %v671
      %v704 = verf.f32.pop %v672
      %v705 = vadd.f32 %v673, 1.0
      %v706 = vadd.f32 %v674, 1.0
      %v707 = vadd.f32 %v675, 1.0
      %v708 = vadd.f32 %v676, 1.0
      %v709 = vadd.f32 %v677, 1.0
      %v710 = vadd.f32 %v678, 1.0
      %v711 = vadd.f32 %v679, 1.0
      %v712 = vadd.f32 %v680, 1.0
      %v713 = vadd.f32 %v681, 1.0
      %v714 = vadd.f32 %v682, 1.0
      %v715 = vadd.f32 %v683, 1.0
      %v716 = vadd.f32 %v684, 1.0
      %v717 = vadd.f32 %v685, 1.0
      %v718 = vadd.f32 %v686, 1.0
      %v719 = vadd.f32 %v687, 1.0
      %v720 = vadd.f32 %v688, 1.0
      %v721 = vadd.f32 %v689, 1.0
      %v722 = vadd.f32 %v690, 1.0
      %v723 = vadd.f32 %v691, 1.0
      %v724 = vadd.f32 %v692, 1.0
      %v725 = vadd.f32 %v693, 1.0
      %v726 = vadd.f32 %v694, 1.0
      %v727 = vadd.f32 %v695, 1.0
      %v728 = vadd.f32 %v696, 1.0
      %v729 = vadd.f32 %v697, 1.0
      %v730 = vadd.f32 %v698, 1.0
      %v731 = vadd.f32 %v699, 1.0
      %v732 = vadd.f32 %v700, 1.0
      %v733 = vadd.f32 %v701, 1.0
      %v734 = vadd.f32 %v702, 1.0
      %v735 = vadd.f32 %v703, 1.0
      %v736 = vadd.f32 %v704, 1.0
      %v737 = vmul.f32 %v609, %v705
      %v738 = vmul.f32 %v610, %v706
      %v739 = vmul.f32 %v611, %v707
      %v740 = vmul.f32 %v612, %v708
      %v741 = vmul.f32 %v613, %v709
      %v742 = vmul.f32 %v614, %v710
      %v743 = vmul.f32 %v615, %v711
      %v744 = vmul.f32 %v616, %v712
      %v745 = vmul.f32 %v617, %v713
      %v746 = vmul.f32 %v618, %v714
      %v747 = vmul.f32 %v619, %v715
      %v748 = vmul.f32 %v620, %v716
      %v749 = vmul.f32 %v621, %v717
      %v750 = vmul.f32 %v622, %v718
      %v751 = vmul.f32 %v623, %v719
      %v752 = vmul.f32 %v624, %v720
      %v753 = vmul.f32 %v625, %v721
      %v754 = vmul.f32 %v626, %v722
      %v755 = vmul.f32 %v627, %v723
      %v756 = vmul.f32 %v628, %v724
      %v757 = vmul.f32 %v629, %v725
      %v758 = vmul.f32 %v630, %v726
      %v759 = vmul.f32 %v631, %v727
      %v760 = vmul.f32 %v632, %v728
      %v761 = vmul.f32 %v633, %v729
      %v762 = vmul.f32 %v634, %v730
      %v763 = vmul.f32 %v635, %v731
      %v764 = vmul.f32 %v636, %v732
      %v765 = vmul.f32 %v637, %v733
      %v766 = vmul.f32 %v638, %v734
      %v767 = vmul.f32 %v639, %v735
      %v768 = vmul.f32 %v640, %v736
      %v769 = vld [vmem:[#allocation2] sm:$0xff]
      %v770 = vld [vmem:[#allocation2 + $0x8] sm:$0xff]
      %v771 = vld [vmem:[#allocation2 + $0x10] sm:$0xff]
      %v772 = vld [vmem:[#allocation2 + $0x18] sm:$0xff]
      %v773 = vld [vmem:[#allocation2 + $0x20] sm:$0xff]
      %v774 = vld [vmem:[#allocation2 + $0x28] sm:$0xff]
      %v775 = vld [vmem:[#allocation2 + $0x30] sm:$0xff]
      %v776 = vld [vmem:[#allocation2 + $0x38] sm:$0xff]
      %v777 = vld [vmem:[#allocation2 + $0x40] sm:$0xff]
      %v778 = vld [vmem:[#allocation2 + $0x48] sm:$0xff]
      %v779 = vld [vmem:[#allocation2 + $0x50] sm:$0xff]
      %v780 = vld [vmem:[#allocation2 + $0x58] sm:$0xff]
      %v781 = vld [vmem:[#allocation2 + $0x60] sm:$0xff]
      %v782 = vld [vmem:[#allocation2 + $0x68] sm:$0xff]
      %v783 = vld [vmem:[#allocation2 + $0x70] sm:$0xff]
      %v784 = vld [vmem:[#allocation2 + $0x78] sm:$0xff]
      %v785 = vld [vmem:[#allocation2 + $0x80] sm:$0xff]
      %v786 = vld [vmem:[#allocation2 + $0x88] sm:$0xff]
      %v787 = vld [vmem:[#allocation2 + $0x90] sm:$0xff]
      %v788 = vld [vmem:[#allocation2 + $0x98] sm:$0xff]
      %v789 = vld [vmem:[#allocation2 + $0xa0] sm:$0xff]
      %v790 = vld [vmem:[#allocation2 + $0xa8] sm:$0xff]
      %v791 = vld [vmem:[#allocation2 + $0xb0] sm:$0xff]
      %v792 = vld [vmem:[#allocation2 + $0xb8] sm:$0xff]
      %v793 = vld [vmem:[#allocation2 + $0xc0] sm:$0xff]
      %v794 = vld [vmem:[#allocation2 + $0xc8] sm:$0xff]
      %v795 = vld [vmem:[#allocation2 + $0xd0] sm:$0xff]
      %v796 = vld [vmem:[#allocation2 + $0xd8] sm:$0xff]
      %v797 = vld [vmem:[#allocation2 + $0xe0] sm:$0xff]
      %v798 = vld [vmem:[#allocation2 + $0xe8] sm:$0xff]
      %v799 = vld [vmem:[#allocation2 + $0xf0] sm:$0xff]
      %v800 = vld [vmem:[#allocation2 + $0xf8] sm:$0xff]
      %v801 = vld [vmem:[%s285] sm:$0xff]
      %v802 = vld [vmem:[%s285 + $0x8] sm:$0xff]
      %v803 = vld [vmem:[%s285 + $0x10] sm:$0xff]
      %v804 = vld [vmem:[%s285 + $0x18] sm:$0xff]
      %v805 = vld [vmem:[%s285 + $0x20] sm:$0xff]
      %v806 = vld [vmem:[%s285 + $0x28] sm:$0xff]
      %v807 = vld [vmem:[%s285 + $0x30] sm:$0xff]
      %v808 = vld [vmem:[%s285 + $0x38] sm:$0xff]
      %v809 = vld [vmem:[%s285 + $0x40] sm:$0xff]
      %v810 = vld [vmem:[%s285 + $0x48] sm:$0xff]
      %v811 = vld [vmem:[%s285 + $0x50] sm:$0xff]
      %v812 = vld [vmem:[%s285 + $0x58] sm:$0xff]
      %v813 = vld [vmem:[%s285 + $0x60] sm:$0xff]
      %v814 = vld [vmem:[%s285 + $0x68] sm:$0xff]
      %v815 = vld [vmem:[%s285 + $0x70] sm:$0xff]
      %v816 = vld [vmem:[%s285 + $0x78] sm:$0xff]
      %817 = vmatprep.subr.mxu0 0.0
      %818 = vmatpush1.msra.mxu0 %v801
      %819 = vmatprep.subr.mxu0 0.0
      %820 = vmatpush1.msra.mxu0 %v802
      %821 = vmatprep.subr.mxu0 0.0
      %822 = vmatpush1.msra.mxu0 %v803
      %823 = vmatprep.subr.mxu0 0.0
      %824 = vmatpush1.msra.mxu0 %v804
      %825 = vmatprep.subr.mxu0 0.0
      %826 = vmatpush1.msra.mxu0 %v805
      %827 = vmatprep.subr.mxu0 0.0
      %828 = vmatpush1.msra.mxu0 %v806
      %829 = vmatprep.subr.mxu0 0.0
      %830 = vmatpush1.msra.mxu0 %v807
      %831 = vmatprep.subr.mxu0 0.0
      %832 = vmatpush1.msra.mxu0 %v808
      %833 = vmatprep.subr.mxu0 0.0
      %834 = vmatpush1.msra.mxu0 %v809
      %835 = vmatprep.subr.mxu0 0.0
      %836 = vmatpush1.msra.mxu0 %v810
      %837 = vmatprep.subr.mxu0 0.0
      %838 = vmatpush1.msra.mxu0 %v811
      %839 = vmatprep.subr.mxu0 0.0
      %840 = vmatpush1.msra.mxu0 %v812
      %841 = vmatprep.subr.mxu0 0.0
      %842 = vmatpush1.msra.mxu0 %v813
      %843 = vmatprep.subr.mxu0 0.0
      %844 = vmatpush1.msra.mxu0 %v814
      %845 = vmatprep.subr.mxu0 0.0
      %846 = vmatpush1.msra.mxu0 %v815
      %847 = vmatprep.subr.mxu0 0.0
      %848 = vmatpush1.msra.mxu0 %v816
      %849 = vmatprep.subr.mxu0 0.0
      %850 = vmatpush1.msra.mxu0 0.0
      %851 = vmatprep.subr.mxu0 0.0
      %852 = vmatpush1.msra.mxu0 0.0
      %853 = vmatprep.subr.mxu0 0.0
      %854 = vmatpush1.msra.mxu0 0.0
      %855 = vmatprep.subr.mxu0 0.0
      %856 = vmatpush1.msra.mxu0 0.0
      %857 = vmatprep.subr.mxu0 0.0
      %858 = vmatpush1.msra.mxu0 0.0
      %859 = vmatprep.subr.mxu0 0.0
      %860 = vmatpush1.msra.mxu0 0.0
      %861 = vmatprep.subr.mxu0 0.0
      %862 = vmatpush1.msra.mxu0 0.0
      %863 = vmatprep.subr.mxu0 0.0
      %864 = vmatpush1.msra.mxu0 0.0
      %865 = vmatprep.subr.mxu0 0.0
      %866 = vmatpush1.msra.mxu0 0.0
      %867 = vmatprep.subr.mxu0 0.0
      %868 = vmatpush1.msra.mxu0 0.0
      %869 = vmatprep.subr.mxu0 0.0
      %870 = vmatpush1.msra.mxu0 0.0
      %871 = vmatprep.subr.mxu0 0.0
      %872 = vmatpush1.msra.mxu0 0.0
      %873 = vmatprep.subr.mxu0 0.0
      %874 = vmatpush1.msra.mxu0 0.0
      %875 = vmatprep.subr.mxu0 0.0
      %876 = vmatpush1.msra.mxu0 0.0
      %877 = vmatprep.subr.mxu0 0.0
      %878 = vmatpush1.msra.mxu0 0.0
      %879 = vmatprep.subr.mxu0 0.0
      %880 = vmatpush1.msra.mxu0 0.0
      %881 = vmatprep.mubr.f32.mxu0 0.0
      %882 = vmatmul.mubr.f32.gmra.mrb[0].mxu0 %v737
      %v883 = vpop.f32.mrb[0].mxu0
      %v884 = vadd.f32 0.0, %v883
      %v885 = vpop.f32.mrb[0].mxu0
      %886 = vmatprep.mubr.f32.mxu0 0.0
      %887 = vmatmul.mubr.f32.gmra.mrb[0].mxu0 %v738
      %v888 = vpop.f32.mrb[0].mxu0
      %v889 = vadd.f32 0.0, %v888
      %v890 = vpop.f32.mrb[0].mxu0
      %891 = vmatprep.mubr.f32.mxu0 0.0
      %892 = vmatmul.mubr.f32.gmra.mrb[0].mxu0 %v739
      %v893 = vpop.f32.mrb[0].mxu0
      %v894 = vadd.f32 0.0, %v893
      %v895 = vpop.f32.mrb[0].mxu0
      %896 = vmatprep.mubr.f32.mxu0 0.0
      %897 = vmatmul.mubr.f32.gmra.mrb[0].mxu0 %v740
      %v898 = vpop.f32.mrb[0].mxu0
      %v899 = vadd.f32 0.0, %v898
      %v900 = vpop.f32.mrb[0].mxu0
      %901 = vmatprep.mubr.f32.mxu0 0.0
      %902 = vmatmul.mubr.f32.gmra.mrb[0].mxu0 %v741
      %v903 = vpop.f32.mrb[0].mxu0
      %v904 = vadd.f32 0.0, %v903
      %v905 = vpop.f32.mrb[0].mxu0
      %906 = vmatprep.mubr.f32.mxu0 0.0
      %907 = vmatmul.mubr.f32.gmra.mrb[0].mxu0 %v742
      %v908 = vpop.f32.mrb[0].mxu0
      %v909 = vadd.f32 0.0, %v908
      %v910 = vpop.f32.mrb[0].mxu0
      %911 = vmatprep.mubr.f32.mxu0 0.0
      %912 = vmatmul.mubr.f32.gmra.mrb[0].mxu0 %v743
      %v913 = vpop.f32.mrb[0].mxu0
      %v914 = vadd.f32 0.0, %v913
      %v915 = vpop.f32.mrb[0].mxu0
      %916 = vmatprep.mubr.f32.mxu0 0.0
      %917 = vmatmul.mubr.f32.gmra.mrb[0].mxu0 %v744
      %v918 = vpop.f32.mrb[0].mxu0
      %v919 = vadd.f32 0.0, %v918
      %v920 = vpop.f32.mrb[0].mxu0
      %921 = vmatprep.mubr.f32.mxu0 0.0
      %922 = vmatmul.mubr.f32.gmra.mrb[0].mxu0 %v745
      %v923 = vpop.f32.mrb[0].mxu0
      %v924 = vadd.f32 0.0, %v923
      %v925 = vpop.f32.mrb[0].mxu0
      %926 = vmatprep.mubr.f32.mxu0 0.0
      %927 = vmatmul.mubr.f32.gmra.mrb[0].mxu0 %v746
      %v928 = vpop.f32.mrb[0].mxu0
      %v929 = vadd.f32 0.0, %v928
      %v930 = vpop.f32.mrb[0].mxu0
      %931 = vmatprep.mubr.f32.mxu0 0.0
      %932 = vmatmul.mubr.f32.gmra.mrb[0].mxu0 %v747
      %v933 = vpop.f32.mrb[0].mxu0
      %v934 = vadd.f32 0.0, %v933
      %v935 = vpop.f32.mrb[0].mxu0
      %936 = vmatprep.mubr.f32.mxu0 0.0
      %937 = vmatmul.mubr.f32.gmra.mrb[0].mxu0 %v748
      %v938 = vpop.f32.mrb[0].mxu0
      %v939 = vadd.f32 0.0, %v938
      %v940 = vpop.f32.mrb[0].mxu0
      %941 = vmatprep.mubr.f32.mxu0 0.0
      %942 = vmatmul.mubr.f32.gmra.mrb[0].mxu0 %v749
      %v943 = vpop.f32.mrb[0].mxu0
      %v944 = vadd.f32 0.0, %v943
      %v945 = vpop.f32.mrb[0].mxu0
      %946 = vmatprep.mubr.f32.mxu0 0.0
      %947 = vmatmul.mubr.f32.gmra.mrb[0].mxu0 %v750
      %v948 = vpop.f32.mrb[0].mxu0
      %v949 = vadd.f32 0.0, %v948
      %v950 = vpop.f32.mrb[0].mxu0
      %951 = vmatprep.mubr.f32.mxu0 0.0
      %952 = vmatmul.mubr.f32.gmra.mrb[0].mxu0 %v751
      %v953 = vpop.f32.mrb[0].mxu0
      %v954 = vadd.f32 0.0, %v953
      %v955 = vpop.f32.mrb[0].mxu0
      %956 = vmatprep.mubr.f32.mxu0 0.0
      %957 = vmatmul.mubr.f32.gmra.mrb[0].mxu0 %v752
      %v958 = vpop.f32.mrb[0].mxu0
      %v959 = vadd.f32 0.0, %v958
      %v960 = vpop.f32.mrb[0].mxu0
      %961 = vmatprep.mubr.f32.mxu0 0.0
      %962 = vmatmul.mubr.f32.gmra.mrb[0].mxu0 %v753
      %v963 = vpop.f32.mrb[0].mxu0
      %v964 = vadd.f32 0.0, %v963
      %v965 = vpop.f32.mrb[0].mxu0
      %966 = vmatprep.mubr.f32.mxu0 0.0
      %967 = vmatmul.mubr.f32.gmra.mrb[0].mxu0 %v754
      %v968 = vpop.f32.mrb[0].mxu0
      %v969 = vadd.f32 0.0, %v968
      %v970 = vpop.f32.mrb[0].mxu0
      %971 = vmatprep.mubr.f32.mxu0 0.0
      %972 = vmatmul.mubr.f32.gmra.mrb[0].mxu0 %v755
      %v973 = vpop.f32.mrb[0].mxu0
      %v974 = vadd.f32 0.0, %v973
      %v975 = vpop.f32.mrb[0].mxu0
      %976 = vmatprep.mubr.f32.mxu0 0.0
      %977 = vmatmul.mubr.f32.gmra.mrb[0].mxu0 %v756
      %v978 = vpop.f32.mrb[0].mxu0
      %v979 = vadd.f32 0.0, %v978
      %v980 = vpop.f32.mrb[0].mxu0
      %981 = vmatprep.mubr.f32.mxu0 0.0
      %982 = vmatmul.mubr.f32.gmra.mrb[0].mxu0 %v757
      %v983 = vpop.f32.mrb[0].mxu0
      %v984 = vadd.f32 0.0, %v983
      %v985 = vpop.f32.mrb[0].mxu0
      %986 = vmatprep.mubr.f32.mxu0 0.0
      %987 = vmatmul.mubr.f32.gmra.mrb[0].mxu0 %v758
      %v988 = vpop.f32.mrb[0].mxu0
      %v989 = vadd.f32 0.0, %v988
      %v990 = vpop.f32.mrb[0].mxu0
      %991 = vmatprep.mubr.f32.mxu0 0.0
      %992 = vmatmul.mubr.f32.gmra.mrb[0].mxu0 %v759
      %v993 = vpop.f32.mrb[0].mxu0
      %v994 = vadd.f32 0.0, %v993
      %v995 = vpop.f32.mrb[0].mxu0
      %996 = vmatprep.mubr.f32.mxu0 0.0
      %997 = vmatmul.mubr.f32.gmra.mrb[0].mxu0 %v760
      %v998 = vpop.f32.mrb[0].mxu0
      %v999 = vadd.f32 0.0, %v998
      %v1000 = vpop.f32.mrb[0].mxu0
      %1001 = vmatprep.mubr.f32.mxu0 0.0
      %1002 = vmatmul.mubr.f32.gmra.mrb[0].mxu0 %v761
      %v1003 = vpop.f32.mrb[0].mxu0
      %v1004 = vadd.f32 0.0, %v1003
      %v1005 = vpop.f32.mrb[0].mxu0
      %1006 = vmatprep.mubr.f32.mxu0 0.0
      %1007 = vmatmul.mubr.f32.gmra.mrb[0].mxu0 %v762
      %v1008 = vpop.f32.mrb[0].mxu0
      %v1009 = vadd.f32 0.0, %v1008
      %v1010 = vpop.f32.mrb[0].mxu0
      %1011 = vmatprep.mubr.f32.mxu0 0.0
      %1012 = vmatmul.mubr.f32.gmra.mrb[0].mxu0 %v763
      %v1013 = vpop.f32.mrb[0].mxu0
      %v1014 = vadd.f32 0.0, %v1013
      %v1015 = vpop.f32.mrb[0].mxu0
      %1016 = vmatprep.mubr.f32.mxu0 0.0
      %1017 = vmatmul.mubr.f32.gmra.mrb[0].mxu0 %v764
      %v1018 = vpop.f32.mrb[0].mxu0
      %v1019 = vadd.f32 0.0, %v1018
      %v1020 = vpop.f32.mrb[0].mxu0
      %1021 = vmatprep.mubr.f32.mxu0 0.0
      %1022 = vmatmul.mubr.f32.gmra.mrb[0].mxu0 %v765
      %v1023 = vpop.f32.mrb[0].mxu0
      %v1024 = vadd.f32 0.0, %v1023
      %v1025 = vpop.f32.mrb[0].mxu0
      %1026 = vmatprep.mubr.f32.mxu0 0.0
      %1027 = vmatmul.mubr.f32.gmra.mrb[0].mxu0 %v766
      %v1028 = vpop.f32.mrb[0].mxu0
      %v1029 = vadd.f32 0.0, %v1028
      %v1030 = vpop.f32.mrb[0].mxu0
      %1031 = vmatprep.mubr.f32.mxu0 0.0
      %1032 = vmatmul.mubr.f32.gmra.mrb[0].mxu0 %v767
      %v1033 = vpop.f32.mrb[0].mxu0
      %v1034 = vadd.f32 0.0, %v1033
      %v1035 = vpop.f32.mrb[0].mxu0
      %1036 = vmatprep.mubr.f32.mxu0 0.0
      %1037 = vmatmul.mubr.f32.gmra.mrb[0].mxu0 %v768
      %v1038 = vpop.f32.mrb[0].mxu0
      %v1039 = vadd.f32 0.0, %v1038
      %v1040 = vpop.f32.mrb[0].mxu0
      %1041 = vdwg.mxu0
      %v1042 = vadd.f32 %v769, %v884
      %v1043 = vadd.f32 %v770, %v889
      %v1044 = vadd.f32 %v771, %v894
      %v1045 = vadd.f32 %v772, %v899
      %v1046 = vadd.f32 %v773, %v904
      %v1047 = vadd.f32 %v774, %v909
      %v1048 = vadd.f32 %v775, %v914
      %v1049 = vadd.f32 %v776, %v919
      %v1050 = vadd.f32 %v777, %v924
      %v1051 = vadd.f32 %v778, %v929
      %v1052 = vadd.f32 %v779, %v934
      %v1053 = vadd.f32 %v780, %v939
      %v1054 = vadd.f32 %v781, %v944
      %v1055 = vadd.f32 %v782, %v949
      %v1056 = vadd.f32 %v783, %v954
      %v1057 = vadd.f32 %v784, %v959
      %v1058 = vadd.f32 %v785, %v964
      %v1059 = vadd.f32 %v786, %v969
      %v1060 = vadd.f32 %v787, %v974
      %v1061 = vadd.f32 %v788, %v979
      %v1062 = vadd.f32 %v789, %v984
      %v1063 = vadd.f32 %v790, %v989
      %v1064 = vadd.f32 %v791, %v994
      %v1065 = vadd.f32 %v792, %v999
      %v1066 = vadd.f32 %v793, %v1004
      %v1067 = vadd.f32 %v794, %v1009
      %v1068 = vadd.f32 %v795, %v1014
      %v1069 = vadd.f32 %v796, %v1019
      %v1070 = vadd.f32 %v797, %v1024
      %v1071 = vadd.f32 %v798, %v1029
      %v1072 = vadd.f32 %v799, %v1034
      %v1073 = vadd.f32 %v800, %v1039
      %1074 = vst [vmem:[#allocation2] sm:$0xff] %v1042
      %1075 = vst [vmem:[#allocation2 + $0x8] sm:$0xff] %v1043
      %1076 = vst [vmem:[#allocation2 + $0x10] sm:$0xff] %v1044
      %1077 = vst [vmem:[#allocation2 + $0x18] sm:$0xff] %v1045
      %1078 = vst [vmem:[#allocation2 + $0x20] sm:$0xff] %v1046
      %1079 = vst [vmem:[#allocation2 + $0x28] sm:$0xff] %v1047
      %1080 = vst [vmem:[#allocation2 + $0x30] sm:$0xff] %v1048
      %1081 = vst [vmem:[#allocation2 + $0x38] sm:$0xff] %v1049
      %1082 = vst [vmem:[#allocation2 + $0x40] sm:$0xff] %v1050
      %1083 = vst [vmem:[#allocation2 + $0x48] sm:$0xff] %v1051
      %1084 = vst [vmem:[#allocation2 + $0x50] sm:$0xff] %v1052
      %1085 = vst [vmem:[#allocation2 + $0x58] sm:$0xff] %v1053
      %1086 = vst [vmem:[#allocation2 + $0x60] sm:$0xff] %v1054
      %1087 = vst [vmem:[#allocation2 + $0x68] sm:$0xff] %v1055
      %1088 = vst [vmem:[#allocation2 + $0x70] sm:$0xff] %v1056
      %1089 = vst [vmem:[#allocation2 + $0x78] sm:$0xff] %v1057
      %1090 = vst [vmem:[#allocation2 + $0x80] sm:$0xff] %v1058
      %1091 = vst [vmem:[#allocation2 + $0x88] sm:$0xff] %v1059
      %1092 = vst [vmem:[#allocation2 + $0x90] sm:$0xff] %v1060
      %1093 = vst [vmem:[#allocation2 + $0x98] sm:$0xff] %v1061
      %1094 = vst [vmem:[#allocation2 + $0xa0] sm:$0xff] %v1062
      %1095 = vst [vmem:[#allocation2 + $0xa8] sm:$0xff] %v1063
      %1096 = vst [vmem:[#allocation2 + $0xb0] sm:$0xff] %v1064
      %1097 = vst [vmem:[#allocation2 + $0xb8] sm:$0xff] %v1065
      %1098 = vst [vmem:[#allocation2 + $0xc0] sm:$0xff] %v1066
      %1099 = vst [vmem:[#allocation2 + $0xc8] sm:$0xff] %v1067
      %1100 = vst [vmem:[#allocation2 + $0xd0] sm:$0xff] %v1068
      %1101 = vst [vmem:[#allocation2 + $0xd8] sm:$0xff] %v1069
      %1102 = vst [vmem:[#allocation2 + $0xe0] sm:$0xff] %v1070
      %1103 = vst [vmem:[#allocation2 + $0xe8] sm:$0xff] %v1071
      %1104 = vst [vmem:[#allocation2 + $0xf0] sm:$0xff] %v1072
      %1105 = vst [vmem:[#allocation2 + $0xf8] sm:$0xff] %v1073
      // Predicated region
      $region45: #{mlp_forward.1} parent=39 // pred_check
        %p1106 = pneg %p293
      $region46: #{mlp_forward.1} parent=39 // pred_check_branch
        %1108 = sbr.rel (%p1106) target = $region48
      $region47: #{mlp_forward.1} parent=39 // pred_region
        %v1109 = vld [vmem:[#allocation2] sm:$0xff]
        %v1110 = vld [vmem:[#allocation2 + $0x8] sm:$0xff]
        %v1111 = vld [vmem:[#allocation2 + $0x10] sm:$0xff]
        %v1112 = vld [vmem:[#allocation2 + $0x18] sm:$0xff]
        %v1113 = vld [vmem:[#allocation2 + $0x20] sm:$0xff]
        %v1114 = vld [vmem:[#allocation2 + $0x28] sm:$0xff]
        %v1115 = vld [vmem:[#allocation2 + $0x30] sm:$0xff]
        %v1116 = vld [vmem:[#allocation2 + $0x38] sm:$0xff]
        %v1117 = vld [vmem:[#allocation2 + $0x40] sm:$0xff]
        %v1118 = vld [vmem:[#allocation2 + $0x48] sm:$0xff]
        %v1119 = vld [vmem:[#allocation2 + $0x50] sm:$0xff]
        %v1120 = vld [vmem:[#allocation2 + $0x58] sm:$0xff]
        %v1121 = vld [vmem:[#allocation2 + $0x60] sm:$0xff]
        %v1122 = vld [vmem:[#allocation2 + $0x68] sm:$0xff]
        %v1123 = vld [vmem:[#allocation2 + $0x70] sm:$0xff]
        %v1124 = vld [vmem:[#allocation2 + $0x78] sm:$0xff]
        %v1125 = vld [vmem:[#allocation2 + $0x80] sm:$0xff]
        %v1126 = vld [vmem:[#allocation2 + $0x88] sm:$0xff]
        %v1127 = vld [vmem:[#allocation2 + $0x90] sm:$0xff]
        %v1128 = vld [vmem:[#allocation2 + $0x98] sm:$0xff]
        %v1129 = vld [vmem:[#allocation2 + $0xa0] sm:$0xff]
        %v1130 = vld [vmem:[#allocation2 + $0xa8] sm:$0xff]
        %v1131 = vld [vmem:[#allocation2 + $0xb0] sm:$0xff]
        %v1132 = vld [vmem:[#allocation2 + $0xb8] sm:$0xff]
        %v1133 = vld [vmem:[#allocation2 + $0xc0] sm:$0xff]
        %v1134 = vld [vmem:[#allocation2 + $0xc8] sm:$0xff]
        %v1135 = vld [vmem:[#allocation2 + $0xd0] sm:$0xff]
        %v1136 = vld [vmem:[#allocation2 + $0xd8] sm:$0xff]
        %v1137 = vld [vmem:[#allocation2 + $0xe0] sm:$0xff]
        %v1138 = vld [vmem:[#allocation2 + $0xe8] sm:$0xff]
        %v1139 = vld [vmem:[#allocation2 + $0xf0] sm:$0xff]
        %v1140 = vld [vmem:[#allocation2 + $0xf8] sm:$0xff]
        %v1141 = vld [vmem:[%s4] sm:$0x1]
        %v1143 = vlaneseq
        %v1144 = vshrl.u32 %v1143, 7
        %v1145 = vsub.s32 0, %v1144
        %v1146 = vrot.slane %v1141, %v1145
        %v1148 = vadd.f32 %v1109, %v1146
        %v1149 = vadd.f32 %v1110, %v1146
        %v1150 = vadd.f32 %v1111, %v1146
        %v1151 = vadd.f32 %v1112, %v1146
        %v1152 = vadd.f32 %v1113, %v1146
        %v1153 = vadd.f32 %v1114, %v1146
        %v1154 = vadd.f32 %v1115, %v1146
        %v1155 = vadd.f32 %v1116, %v1146
        %v1156 = vadd.f32 %v1117, %v1146
        %v1157 = vadd.f32 %v1118, %v1146
        %v1158 = vadd.f32 %v1119, %v1146
        %v1159 = vadd.f32 %v1120, %v1146
        %v1160 = vadd.f32 %v1121, %v1146
        %v1161 = vadd.f32 %v1122, %v1146
        %v1162 = vadd.f32 %v1123, %v1146
        %v1163 = vadd.f32 %v1124, %v1146
        %v1164 = vadd.f32 %v1125, %v1146
        %v1165 = vadd.f32 %v1126, %v1146
        %v1166 = vadd.f32 %v1127, %v1146
        %v1167 = vadd.f32 %v1128, %v1146
        %v1168 = vadd.f32 %v1129, %v1146
        %v1169 = vadd.f32 %v1130, %v1146
        %v1170 = vadd.f32 %v1131, %v1146
        %v1171 = vadd.f32 %v1132, %v1146
        %v1172 = vadd.f32 %v1133, %v1146
        %v1173 = vadd.f32 %v1134, %v1146
        %v1174 = vadd.f32 %v1135, %v1146
        %v1175 = vadd.f32 %v1136, %v1146
        %v1176 = vadd.f32 %v1137, %v1146
        %v1177 = vadd.f32 %v1138, %v1146
        %v1178 = vadd.f32 %v1139, %v1146
        %v1179 = vadd.f32 %v1140, %v1146
        %1180 = vst [vmem:[%s291] sm:$0xff] %v1148
        %1181 = vst [vmem:[%s291 + $0x8] sm:$0xff] %v1149
        %1182 = vst [vmem:[%s291 + $0x10] sm:$0xff] %v1150
        %1183 = vst [vmem:[%s291 + $0x18] sm:$0xff] %v1151
        %1184 = vst [vmem:[%s291 + $0x20] sm:$0xff] %v1152
        %1185 = vst [vmem:[%s291 + $0x28] sm:$0xff] %v1153
        %1186 = vst [vmem:[%s291 + $0x30] sm:$0xff] %v1154
        %1187 = vst [vmem:[%s291 + $0x38] sm:$0xff] %v1155
        %1188 = vst [vmem:[%s291 + $0x40] sm:$0xff] %v1156
        %1189 = vst [vmem:[%s291 + $0x48] sm:$0xff] %v1157
        %1190 = vst [vmem:[%s291 + $0x50] sm:$0xff] %v1158
        %1191 = vst [vmem:[%s291 + $0x58] sm:$0xff] %v1159
        %1192 = vst [vmem:[%s291 + $0x60] sm:$0xff] %v1160
        %1193 = vst [vmem:[%s291 + $0x68] sm:$0xff] %v1161
        %1194 = vst [vmem:[%s291 + $0x70] sm:$0xff] %v1162
        %1195 = vst [vmem:[%s291 + $0x78] sm:$0xff] %v1163
        %1196 = vst [vmem:[%s291 + $0x80] sm:$0xff] %v1164
        %1197 = vst [vmem:[%s291 + $0x88] sm:$0xff] %v1165
        %1198 = vst [vmem:[%s291 + $0x90] sm:$0xff] %v1166
        %1199 = vst [vmem:[%s291 + $0x98] sm:$0xff] %v1167
        %1200 = vst [vmem:[%s291 + $0xa0] sm:$0xff] %v1168
        %1201 = vst [vmem:[%s291 + $0xa8] sm:$0xff] %v1169
        %1202 = vst [vmem:[%s291 + $0xb0] sm:$0xff] %v1170
        %1203 = vst [vmem:[%s291 + $0xb8] sm:$0xff] %v1171
        %1204 = vst [vmem:[%s291 + $0xc0] sm:$0xff] %v1172
        %1205 = vst [vmem:[%s291 + $0xc8] sm:$0xff] %v1173
        %1206 = vst [vmem:[%s291 + $0xd0] sm:$0xff] %v1174
        %1207 = vst [vmem:[%s291 + $0xd8] sm:$0xff] %v1175
        %1208 = vst [vmem:[%s291 + $0xe0] sm:$0xff] %v1176
        %1209 = vst [vmem:[%s291 + $0xe8] sm:$0xff] %v1177
        %1210 = vst [vmem:[%s291 + $0xf0] sm:$0xff] %v1178
        %1211 = vst [vmem:[%s291 + $0xf8] sm:$0xff] %v1179
      $region48: #{mlp_forward.1} parent=39 // pred_fallthru
        _
      %s1212 = smul.u32 32, %s20
      %p1213 = scmp.lt.s32.totalorder %s1212, 63
      %s1214 = scalar_select %p1213, %s1212, 63
      %s1215 = smul.addr %s1214, 8
      %s1216 = scalar_lea.vmem %s5, %s1215
      // Predicated region
      $region49: #{mlp_forward.1} parent=39 // pred_check
        %p1217 = pneg %p171
      $region50: #{mlp_forward.1} parent=39 // pred_check_branch
        %1219 = sbr.rel (%p1217) target = $region52
      $region51: #{mlp_forward.1} parent=39 // pred_region
        %s1220 = smul.u32 32, %s20
      $region52: #{mlp_forward.1} parent=39 // pred_fallthru
        _
    $region40: #{mlp_forward.1} parent=5 // pred_fallthru
      _
    %p1221 = scmp.le.s32.totalorder 2, %s11
    // Predicated region
    $region53: #{mlp_forward.1} parent=5 // pred_check
      %p1222 = pneg %p1221
    $region54: #{mlp_forward.1} parent=5 // pred_check_branch
      %1224 = sbr.rel (%p1222) target = $region56
    $region55: #{mlp_forward.1} parent=5 // pred_region
      %s1225 = ssub.s32 %s11, 2
      // Predicated region
      $region57: #{mlp_forward.1} parent=55 // pred_check
        %p1226 = pneg %p177
      $region58: #{mlp_forward.1} parent=55 // pred_check_branch
        %1228 = sbr.rel (%p1226) target = $region60
      $region59: #{mlp_forward.1} parent=55 // pred_region
        %s1229 = smul.u32 32, %s22
        %p1230 = scmp.lt.s32.totalorder %s1229, 63
        %s1231 = scalar_select %p1230, %s1229, 63
        %s1232 = smul.addr %s1231, 8
        %s1233 = scalar_lea.vmem %s5, %s1232
      $region60: #{mlp_forward.1} parent=55 // pred_fallthru
        _
    $region56: #{mlp_forward.1} parent=5 // pred_fallthru
      _
  $region6: #{mlp_forward.1} parent=0 // loop_footer
    %s15 = sadd.s32 1, %s11
  $region7: #{mlp_forward.1} parent=0 // loop_footer_branch
    %10 = sbr.rel target = $region3
  $region8: #{mlp_forward.1} parent=0 // loop_exit
    _

</llo_original>
